<compile_context>
chip_gen: v7x
topology: tpu7x:2x2x1
jax: 0.10.0
libtpu: 0.0.40
codegen_flags: <defaults>
</compile_context>

<pallas_src>
import numpy as np
import jax
import jax.numpy as jnp
from jax.experimental import pallas as pl
from jax.experimental.pallas import tpu as pltpu


def _round_up(x, m):
    return ((x + m - 1) // m) * m


def _memory_kernel(x_ref, w_ref, o_ref):
    # Autocast analog: bf16 operands on the MXU with f32 accumulation.
    # The x cast is done in-kernel (hidden under the DMA pipeline) so the
    # wrapper never materializes a bf16 copy of the activations in HBM.
    x = x_ref[...].astype(jnp.bfloat16)
    w = w_ref[...].astype(jnp.bfloat16)  # no-op when the weight is pre-cast
    o_ref[...] = jnp.dot(
        x, w, preferred_element_type=jnp.float32
    ).astype(o_ref.dtype)


def memory_block_forward(indicator, weight_t, *, out_dtype=jnp.bfloat16,
                         block_b=2048):
    """y[B, N] = indicator[B, K] @ weight_t[K, N]  (bias-free Linear).

    indicator: (B, K) float32 (or bf16) — NOT pre-cast in the wrapper.
    weight_t : (K, N), ideally bf16 (see init_memory_block).
    out_dtype: result dtype; bf16 by default (autocast analog, halves the
               dominant output HBM traffic).  Pass jnp.float32 for f32 output.
    """
    B, K = indicator.shape
    K2, N = weight_t.shape
    assert K == K2

    # Batch tile: multiple of 8 (sublane granularity), capped at block_b, and
    # sized so the grid has >=2 steps when B allows it (lets both v7x
    # TensorCores share the HBM-bound work; the extra ~0.35 us grid step is
    # negligible).  The ragged last block is handled by Pallas: out-of-range
    # output rows are discarded, so no padding and no out[:B] slice.
    tb = max(8, min(block_b, _round_up(pl.cdiv(B, 2), 8)))
    grid = (pl.cdiv(B, tb),)

    x_bytes = indicator.dtype.itemsize
    w_bytes = weight_t.dtype.itemsize
    o_bytes = np.dtype(out_dtype).itemsize

    return pl.pallas_call(
        _memory_kernel,
        out_shape=jax.ShapeDtypeStruct((B, N), out_dtype),
        grid=grid,
        in_specs=[
            # Batch-tiled activations.
            pl.BlockSpec((tb, K), lambda b: (b, 0)),
            # Weight: constant index_map -> stays VMEM-resident across the
            # whole grid (no per-step re-DMA).
            pl.BlockSpec((K, N), lambda b: (0, 0)),
        ],
        out_specs=pl.BlockSpec((tb, N), lambda b: (b, 0)),
        compiler_params=pltpu.CompilerParams(
            # Independent batch tiles.
            dimension_semantics=("parallel",),
            # Tiles are ~1.2 MiB double-buffered; explicit headroom so the
            # same code fits v7x's 64 MiB physical VMEM.
            vmem_limit_bytes=32 * 1024 * 1024,
        ),
        cost_estimate=pl.CostEstimate(
            flops=2 * B * K * N,
            transcendentals=0,
            bytes_accessed=B * K * x_bytes + K * N * w_bytes + B * N * o_bytes,
        ),
    )(indicator, weight_t)


def init_memory_block(attr_nums, dim_chunk, key, dtype=jnp.bfloat16):
    """Init matching nn.Linear(sum(attr_nums), len(attr_nums)*dim_chunk, bias=False).

    Returns the weight pre-transposed to (in_features, out_features) and
    pre-cast to `dtype` (bf16 by default) so the forward path has no per-call
    weight convert.
    """
    in_features = int(np.sum(attr_nums))
    out_features = len(attr_nums) * dim_chunk
    # nn.Linear default init: U(-1/sqrt(in_features), 1/sqrt(in_features))
    bound = 1.0 / np.sqrt(in_features)
    w = jax.random.uniform(
        key, (out_features, in_features), jnp.float32, minval=-bound, maxval=bound
    )
    return w.T.astype(dtype)  # (K, N)


def _reference(indicator, weight_t, out_dtype):
    # Matches the kernel's numerics: bf16-rounded operands, f32 accumulation,
    # final cast to the requested output dtype.
    x = indicator.astype(jnp.bfloat16).astype(jnp.float32)
    w = weight_t.astype(jnp.bfloat16).astype(jnp.float32)
    return (x @ w).astype(out_dtype)


if __name__ == "__main__":
    # Small, forward-consistent shapes:
    #   attr_nums = [3, 5, 4, 4]  ->  sum = 16 input features (K)
    #   dim_chunk = 32            ->  4 * 32 = 128 output features (N, lane-dense)
    attr_nums = [3, 5, 4, 4]
    dim_chunk = 32

    key = jax.random.PRNGKey(0)
    k_w, k_x1, k_x2 = jax.random.split(key, 3)

    weight_t = init_memory_block(attr_nums, dim_chunk, k_w)  # (16, 128) bf16
    K = int(np.sum(attr_nums))
    N = len(attr_nums) * dim_chunk

    # Case 1: aligned batch, default bf16 output (autocast analog).
    batch1 = 8
    x1 = jax.random.uniform(k_x1, (batch1, K), jnp.float32)
    y1 = jax.block_until_ready(memory_block_forward(x1, weight_t))
    assert y1.shape == (batch1, N) and y1.dtype == jnp.bfloat16
    ref1 = _reference(x1, weight_t, jnp.bfloat16)
    np.testing.assert_allclose(
        np.asarray(y1.astype(jnp.float32)),
        np.asarray(ref1.astype(jnp.float32)),
        rtol=1e-2, atol=1e-2,
    )

    # Case 2: ragged batch (exercises the partial last block — no pad/slice),
    # f32 output via the dtype knob.
    batch2 = 20
    x2 = jax.random.uniform(k_x2, (batch2, K), jnp.float32)
    y2 = jax.block_until_ready(
        memory_block_forward(x2, weight_t, out_dtype=jnp.float32)
    )
    assert y2.shape == (batch2, N) and y2.dtype == jnp.float32
    ref2 = _reference(x2, weight_t, jnp.float32)
    np.testing.assert_allclose(np.asarray(y2), np.asarray(ref2),
                               rtol=1e-2, atol=1e-2)
    # Loose check vs. full-f32 math to confirm bf16 operands didn't hurt much.
    np.testing.assert_allclose(
        np.asarray(y2),
        np.asarray(x2 @ weight_t.astype(jnp.float32)),
        rtol=3e-2, atol=3e-2,
    )

    print("KERNEL_OK")
</pallas_src>

<mosaic_0001>
module attributes {stable_mosaic.version = 11 : i64} {
  func.func @_memory_kernel(%arg0: i32, %arg1: memref<8x16xf32, #tpu.memory_space<vmem>>, %arg2: memref<16x128xbf16, #tpu.memory_space<vmem>>, %arg3: memref<8x128xbf16, #tpu.memory_space<vmem>>) attributes {dimension_semantics = [#tpu.dimension_semantics<parallel>], iteration_bounds = array<i64: 1>, scalar_prefetch = 0 : i64, scratch_operands = 0 : i64, tpu.core_type = #tpu.core_type<tc>, window_params = [{transform_indices = @transform_0, window_bounds = array<i64: 8, 16>}, {pipeline_mode = #tpu.pipeline_mode<synchronous>, transform_indices = @transform_1, window_bounds = array<i64: 16, 128>}, {transform_indices = @transform_2, window_bounds = array<i64: 8, 128>}]} {
    %c0 = arith.constant 0 : index
    %c0_0 = arith.constant 0 : index
    %0 = vector.load %arg1[%c0, %c0_0] : memref<8x16xf32, #tpu.memory_space<vmem>>, vector<8x16xf32>
    %1 = arith.truncf %0 : vector<8x16xf32> to vector<8x16xbf16>
    %c0_1 = arith.constant 0 : index
    %c0_2 = arith.constant 0 : index
    %2 = vector.load %arg2[%c0_1, %c0_2] : memref<16x128xbf16, #tpu.memory_space<vmem>>, vector<16x128xbf16>
    %cst = arith.constant dense<0.000000e+00> : vector<8x128xf32>
    %3 = tpu.matmul %1, %2, %cst {dimension_numbers = #tpu.dot_dimension_numbers<[1], [0], [0], [1], [0, 0, 1, 1], [], []>} : vector<8x16xbf16>, vector<16x128xbf16>, vector<8x128xf32> -> vector<8x128xf32>
    %4 = arith.truncf %3 : vector<8x128xf32> to vector<8x128xbf16>
    %c0_3 = arith.constant 0 : index
    %c0_4 = arith.constant 0 : index
    %5 = vector.load %arg3[%c0_3, %c0_4] : memref<8x128xbf16, #tpu.memory_space<vmem>>, vector<8x128xbf16>
    tpu.vector_store %arg3[%c0_3, %c0_4], %4 {strides = array<i32>} : memref<8x128xbf16, #tpu.memory_space<vmem>>, vector<8x128xbf16>,
    return
  }
  func.func @transform_0(%arg0: i32) -> (i32, i32) {
    %c0_i32 = arith.constant 0 : i32
    %c0_i32_0 = arith.constant 0 : i32
    return %arg0, %c0_i32 : i32, i32
  }
  func.func @transform_1(%arg0: i32) -> (i32, i32) {
    %c0_i32 = arith.constant 0 : i32
    %c0_i32_0 = arith.constant 0 : i32
    %c0_i32_1 = arith.constant 0 : i32
    return %c0_i32, %c0_i32_0 : i32, i32
  }
  func.func @transform_2(%arg0: i32) -> (i32, i32) {
    %c0_i32 = arith.constant 0 : i32
    %c0_i32_0 = arith.constant 0 : i32
    return %arg0, %c0_i32 : i32, i32
  }
}

</mosaic_0001>

<llo_original>
// kernel: tpu_custom_call.1
$region0: #{tpu_custom_call.1}
  #allocation0 [shape = 'u32[]', space=smem, size = 0x4, offset = 0x4, fixed_abs, tag = 'smem constant byte address 0x4 - core index']
  #allocation1 [shape = 'u32[144,128]{1,0:T(1,128)}', space=vmem, size = 0x12000, scoped, tag = 'internal scratch']
  %s0 = inlined_call_operand.hbm [shape: f32[8,16], index: 0, kind: input, shape index: {}]
  %s1 = inlined_call_operand.hbm [shape: bf16[16,128], index: 1, kind: input, shape index: {}]
  %s2 = inlined_call_operand.hbm [shape: bf16[8,128], index: 2, kind: output, shape index: {}]
  %s3 = sld [smem:[#allocation0]]
  $region26: #{tpu_custom_call.1} parent=0
    _
  %s5 = ssub.s32 1, %s3
  %s6 = scalar_select 0, %s5, %s3
  $region1: #{tpu_custom_call.1} parent=0
    #allocation2 [shape = 'u8[4096]{0}', space=vmem, size = 0x1000, scoped, tag = 'input window, operand 0, single buffered']
    #allocation3 [shape = 's32[1]{0}', space=sflag, size = 0x4, scoped, tag = 'scoped memory for tpu_custom_call.1']
    #allocation4 [shape = 's32[1]{0}', space=sflag, size = 0x4, scoped, tag = 'scoped memory for tpu_custom_call.1']
    #allocation5 [shape = 'u8[4096]{0}', space=vmem, size = 0x1000, scoped, tag = 'input window, operand 1, single buffered']
    #allocation6 [shape = 's32[1]{0}', space=sflag, size = 0x4, scoped, tag = 'scoped memory for tpu_custom_call.1']
    #allocation7 [shape = 'u8[2048]{0}', space=vmem, size = 0x800, scoped, tag = 'output window, operand 0, single buffered']
    %7 = vsyncpa [#allocation3], 0
    %8 = vsyncpa [#allocation6], 0
    %9 = vsyncpa [#allocation4], 0
    // Predicated region
    $region2: #{tpu_custom_call.1} parent=1 // pred_check
      _
    $region3: #{tpu_custom_call.1} parent=1 // pred_check_branch
      %11 = sbr.rel (0) target = $region5
    $region4: #{tpu_custom_call.1} parent=1 // pred_region
      %s13 = ssub.s32 128, 128
      %14 = vsyncadd [#allocation3], %s13
      %s16 = sshll.u32 [#allocation2], 4
      %s17 = int_to_ptr.vmem [resolvable:$true] %s16
      %19 = dma.hbm_to_vmem [thread:$0]  %s0, 128, %s17, [#allocation3]
    $region5: #{tpu_custom_call.1} parent=1 // pred_fallthru
      _
    // Predicated region
    $region6: #{tpu_custom_call.1} parent=1 // pred_check
      _
    $region7: #{tpu_custom_call.1} parent=1 // pred_check_branch
      %21 = sbr.rel (0) target = $region9
    $region8: #{tpu_custom_call.1} parent=1 // pred_region
      %s23 = ssub.s32 128, 128
      %24 = vsyncadd [#allocation6], %s23
      %s25 = sshll.u32 [#allocation5], 4
      %s26 = int_to_ptr.vmem [resolvable:$true] %s25
      %31 = dma.hbm_to_vmem [thread:$0]  %s1, 128, %s26, [#allocation6], 64, 64, 4
    $region9: #{tpu_custom_call.1} parent=1 // pred_fallthru
      _
    // Predicated region
    $region10: #{tpu_custom_call.1} parent=1 // pred_check
      _
    $region11: #{tpu_custom_call.1} parent=1 // pred_check_branch
      %33 = sbr.rel (0) target = $region13
    $region12: #{tpu_custom_call.1} parent=1 // pred_region
      %34 = dma.done [#allocation3], 128
    $region13: #{tpu_custom_call.1} parent=1 // pred_fallthru
      _
    // Predicated region
    $region14: #{tpu_custom_call.1} parent=1 // pred_check
      _
    $region15: #{tpu_custom_call.1} parent=1 // pred_check_branch
      %36 = sbr.rel (0) target = $region17
    $region16: #{tpu_custom_call.1} parent=1 // pred_region
      %37 = dma.done [#allocation6], 128
    $region17: #{tpu_custom_call.1} parent=1 // pred_fallthru
      _
    %v39 = vld [vmem:[#allocation2] sm:$0xff]
    %v40 = vpack.c.bf16 %v39, %v39
    %v41 = vld [vmem:[#allocation5] sm:$0xf]
    %v42 = vld [vmem:[#allocation5 + $0x4] sm:$0xf]
    %v45 = vunpack.c.l.b16 %v41
    %v46 = vunpack.c.l.b16 %v42
    %v47 = vpack.c.b16 %v46, %v45
    %vm49 = vcmask 130048
    %v51 = vsel %vm49, %v40, 0
    %53 = vmatprep.subr.bf16.mxu0 0
    %54 = vmatpush1.bf16.msra.mxu0 %v47
    %55 = vmatprep.subr.bf16.mxu0 0
    %56 = vmatpush1.bf16.msra.mxu0 0
    %57 = vmatprep.subr.bf16.mxu0 0
    %58 = vmatpush1.bf16.msra.mxu0 0
    %59 = vmatprep.subr.bf16.mxu0 0
    %60 = vmatpush1.bf16.msra.mxu0 0
    %61 = vmatprep.subr.bf16.mxu0 0
    %62 = vmatpush1.bf16.msra.mxu0 0
    %63 = vmatprep.subr.bf16.mxu0 0
    %64 = vmatpush1.bf16.msra.mxu0 0
    %65 = vmatprep.subr.bf16.mxu0 0
    %66 = vmatpush1.bf16.msra.mxu0 0
    %67 = vmatprep.subr.bf16.mxu0 0
    %68 = vmatpush1.bf16.msra.mxu0 0
    %69 = vmatprep.subr.bf16.mxu0 0
    %70 = vmatpush1.bf16.msra.mxu0 0
    %71 = vmatprep.subr.bf16.mxu0 0
    %72 = vmatpush1.bf16.msra.mxu0 0
    %73 = vmatprep.subr.bf16.mxu0 0
    %74 = vmatpush1.bf16.msra.mxu0 0
    %75 = vmatprep.subr.bf16.mxu0 0
    %76 = vmatpush1.bf16.msra.mxu0 0
    %77 = vmatprep.subr.bf16.mxu0 0
    %78 = vmatpush1.bf16.msra.mxu0 0
    %79 = vmatprep.subr.bf16.mxu0 0
    %80 = vmatpush1.bf16.msra.mxu0 0
    %81 = vmatprep.subr.bf16.mxu0 0
    %82 = vmatpush1.bf16.msra.mxu0 0
    %83 = vmatprep.subr.bf16.mxu0 0
    %84 = vmatpush1.bf16.msra.mxu0 0
    %85 = vmatprep.mubr.bf16.mxu0 0
    %86 = vmatmul.mubr.bf16.gmra.mrb[0].mxu0 %v51
    %v87 = vpop.f32.mrb[0].mxu0
    %v88 = vadd.f32 0.0, %v87
    %v89 = vpop.f32.mrb[0].mxu0
    %v90 = vpop.f32.mrb[0].mxu0
    %v91 = vpop.f32.mrb[0].mxu0
    %92 = vdwg.mxu0
    %v93 = vpack.c.bf16 %v88, %v88
    %94 = vst [vmem:[#allocation7] sm:$0xf] %v93
    // Predicated region
    $region18: #{tpu_custom_call.1} parent=1 // pred_check
      _
    $region19: #{tpu_custom_call.1} parent=1 // pred_check_branch
      %96 = sbr.rel (0) target = $region21
    $region20: #{tpu_custom_call.1} parent=1 // pred_region
      %s98 = ssub.s32 64, 64
      %99 = vsyncadd [#allocation4], %s98
      %s101 = sshll.u32 [#allocation7], 4
      %s102 = int_to_ptr.vmem [resolvable:$true] %s101
      %104 = dma.vmem_to_hbm [thread:$0]  %s102, 64, %s2, [#allocation4]
    $region21: #{tpu_custom_call.1} parent=1 // pred_fallthru
      _
    // Predicated region
    $region22: #{tpu_custom_call.1} parent=1 // pred_check
      _
    $region23: #{tpu_custom_call.1} parent=1 // pred_check_branch
      %106 = sbr.rel (0) target = $region25
    $region24: #{tpu_custom_call.1} parent=1 // pred_region
      %107 = dma.done [#allocation4], 64
    $region25: #{tpu_custom_call.1} parent=1 // pred_fallthru
      _
    %108 = vsyncpa [#allocation3], 1
    %109 = vsyncpa [#allocation6], 1
    %110 = vsyncpa [#allocation4], 1

</llo_original>
